<compile_context>
chip_gen: v7x
topology: tpu7x:2x2x1
jax: 0.10.0
libtpu: 0.0.40
codegen_flags: <defaults>
</compile_context>

<pallas_src>
import functools

import jax
import jax.numpy as jnp
from jax.experimental import pallas as pl
from jax.experimental.pallas import tpu as pltpu


# ----------------------------- helpers ---------------------------------------
def _round_up(x, m):
    return ((x + m - 1) // m) * m


def _pick_tile(n, candidates):
    for c in candidates:
        if n % c == 0:
            return c
    return n


def _vmem_budget(est_bytes):
    # Derived from block bytes; >= default scoped limit, capped well under v7x's
    # 64 MiB physical VMEM (and trivially under v5e/v6e's 128 MiB).
    return int(min(max(2 * est_bytes, 32 * 1024 * 1024), 48 * 1024 * 1024))


def build_count_adjacency(edge_index, num_nodes):
    """Dense edge-count matrix A_cnt[dst, src] = multiplicity(src -> dst) and
    f32 inverse in-degree. Matches PyG SAGEConv 'mean' aggregation (nodes with
    no incoming edges aggregate to zero; duplicate edges counted)."""
    src, dst = edge_index[0], edge_index[1]
    a = jnp.zeros((num_nodes, num_nodes), jnp.float32).at[dst, src].add(1.0)
    deg = a.sum(axis=1)
    inv_deg = jnp.where(deg > 0, 1.0 / deg, 0.0)
    return a, inv_deg


# ----------------------------- Pallas kernels --------------------------------
def _proj_kernel(x_ref, wcat_ref, bcat_ref, hl_ref, hr_ref, *, d_out_p):
    """Fused projection for one layer:
        h_full = x @ [W_l | W_r] + [0 | b]
        h_l    = bf16(h_full[:, :d_out_p])      (to be aggregated; bias NOT here)
        h_root = h_full[:, d_out_p:]            (f32; x @ W_r + b)
    """
    h = jnp.dot(x_ref[...], wcat_ref[...], preferred_element_type=jnp.float32)
    h = h + bcat_ref[...]
    hl_ref[...] = h[:, :d_out_p].astype(hl_ref.dtype)
    hr_ref[...] = h[:, d_out_p:]


def _agg_kernel(a_ref, hl_ref, hr_ref, meta_ref, o_ref, acc_ref, *, apply_relu):
    """Tiled mean-aggregation + epilogue for one layer:
        y = (A_cnt @ h_l) * inv_deg + h_root    (+ReLU for non-final layers)
    Grid = (row tiles ["parallel"], k tiles ["arbitrary"]), f32 accumulator.
    Padded rows are zeroed via the row-valid mask (meta[:, 1])."""
    k = pl.program_id(1)

    @pl.when(k == 0)
    def _():
        acc_ref[...] = jnp.zeros_like(acc_ref)

    acc_ref[...] += jnp.dot(a_ref[...], hl_ref[...],
                            preferred_element_type=jnp.float32)

    @pl.when(k == pl.num_programs(1) - 1)
    def _():
        meta = meta_ref[...]                       # (TM, 2) f32
        inv_deg = meta[:, 0:1]                     # mean normalization (f32)
        valid = meta[:, 1:2]                       # 1.0 for real rows, 0.0 padded
        y = acc_ref[...] * inv_deg + hr_ref[...]
        if apply_relu:
            y = jnp.maximum(y, 0.0)
        o_ref[...] = (y * valid).astype(o_ref.dtype)


# ----------------------------- wrapper ---------------------------------------
def bsage_forward(x, edge_index, params):
    """BSAGE.forward in eval mode: per layer a projection pallas_call and a
    tiled aggregation pallas_call (row-parallel + k-reduction)."""
    n, in_c = x.shape
    num_layers = len(params)
    out_c = params[-1][0].shape[1]

    NP = _round_up(n, 128)
    TM = _pick_tile(NP, (256, 128))        # aggregation row tile (megacore axis)
    TK = _pick_tile(NP, (512, 256, 128))   # aggregation k tile
    TMP = _pick_tile(NP, (512, 256, 128))  # projection row tile

    a_cnt, inv_deg = build_count_adjacency(edge_index, n)
    a_pad = jnp.zeros((NP, NP), jnp.bfloat16).at[:n, :n].set(
        a_cnt.astype(jnp.bfloat16))
    meta = jnp.zeros((NP, 2), jnp.float32)
    meta = meta.at[:n, 0].set(inv_deg)
    meta = meta.at[:n, 1].set(1.0)

    dpi0 = _round_up(in_c, 128)
    h = jnp.zeros((NP, dpi0), jnp.bfloat16).at[:n, :in_c].set(
        x.astype(jnp.bfloat16))

    for l, (wl, wr, b) in enumerate(params):
        d_in, d_out = wl.shape
        dpi = _round_up(d_in, 128)
        dpo = _round_up(d_out, 128)
        last = (l == num_layers - 1)
        out_dtype = jnp.float32 if last else jnp.bfloat16
        out_bytes = 4 if last else 2

        # W_cat = [W_l | W_r]; bias lives in the root half (added once per row,
        # never aggregated).
        wcat = jnp.zeros((dpi, 2 * dpo), jnp.bfloat16)
        wcat = wcat.at[:d_in, :d_out].set(wl.astype(jnp.bfloat16))
        wcat = wcat.at[:d_in, dpo:dpo + d_out].set(wr.astype(jnp.bfloat16))
        bcat = jnp.zeros((1, 2 * dpo), jnp.float32).at[0, dpo:dpo + d_out].set(b)

        # ---------------- projection: h_l (bf16), h_root (f32) ----------------
        proj_vmem = (2 * TMP * dpi * 2            # x blocks (double-buffered)
                     + 2 * dpi * 2 * dpo * 2      # W_cat
                     + 2 * 2 * dpo * 4            # bias
                     + 2 * TMP * dpo * (2 + 4))   # two outputs
        h_l, h_root = pl.pallas_call(
            functools.partial(_proj_kernel, d_out_p=dpo),
            out_shape=(jax.ShapeDtypeStruct((NP, dpo), jnp.bfloat16),
                       jax.ShapeDtypeStruct((NP, dpo), jnp.float32)),
            grid=(NP // TMP,),
            in_specs=[
                pl.BlockSpec((TMP, dpi), lambda i: (i, 0)),
                pl.BlockSpec((dpi, 2 * dpo), lambda i: (0, 0)),
                pl.BlockSpec((1, 2 * dpo), lambda i: (0, 0)),
            ],
            out_specs=(pl.BlockSpec((TMP, dpo), lambda i: (i, 0)),
                       pl.BlockSpec((TMP, dpo), lambda i: (i, 0))),
            compiler_params=pltpu.CompilerParams(
                dimension_semantics=("parallel",),
                vmem_limit_bytes=_vmem_budget(proj_vmem)),
            cost_estimate=pl.CostEstimate(
                flops=2 * NP * dpi * 2 * dpo, transcendentals=0,
                bytes_accessed=NP * dpi * 2 + dpi * 2 * dpo * 2
                + NP * dpo * (2 + 4)),
        )(h, wcat, bcat)

        # ---------------- aggregation: y = (A @ h_l)/deg + h_root -------------
        agg_vmem = (2 * TM * TK * 2               # A tiles (double-buffered)
                    + 2 * TK * dpo * 2            # h_l tiles
                    + 2 * TM * dpo * 4            # h_root (resident)
                    + 2 * TM * 128 * 4            # meta (lane-padded)
                    + 2 * TM * dpo * out_bytes    # output
                    + TM * dpo * 4)               # f32 accumulator scratch
        h = pl.pallas_call(
            functools.partial(_agg_kernel, apply_relu=not last),
            out_shape=jax.ShapeDtypeStruct((NP, dpo), out_dtype),
            grid=(NP // TM, NP // TK),
            in_specs=[
                pl.BlockSpec((TM, TK), lambda i, k: (i, k)),
                pl.BlockSpec((TK, dpo), lambda i, k: (k, 0)),
                pl.BlockSpec((TM, dpo), lambda i, k: (i, 0)),
                pl.BlockSpec((TM, 2), lambda i, k: (i, 0)),
            ],
            out_specs=pl.BlockSpec((TM, dpo), lambda i, k: (i, 0)),
            scratch_shapes=[pltpu.VMEM((TM, dpo), jnp.float32)],
            compiler_params=pltpu.CompilerParams(
                dimension_semantics=("parallel", "arbitrary"),
                vmem_limit_bytes=_vmem_budget(agg_vmem)),
            cost_estimate=pl.CostEstimate(
                flops=2 * NP * NP * dpo, transcendentals=0,
                bytes_accessed=NP * NP * 2 + NP * dpo * (2 + 4)
                + NP * 2 * 4 + NP * dpo * out_bytes),
        )(a_pad, h_l, h_root, meta)

    return h[:n, :out_c].astype(jnp.float32)


# ----------------------------- params ----------------------------------------
def init_bsage_params(key, in_channels, hidden_channels, out_channels, num_layers):
    """Deterministic Glorot-ish init; same shapes as PyG SAGEConv.
    Each layer: W_l (with bias) and W_r (no bias), stored as (d_in, d_out)."""
    dims = [in_channels] + [hidden_channels] * (num_layers - 1) + [out_channels]
    params = []
    for layer in range(num_layers):
        d_in, d_out = dims[layer], dims[layer + 1]
        key, k1, k2, k3 = jax.random.split(key, 4)
        scale = (6.0 / (d_in + d_out)) ** 0.5
        w_l = jax.random.uniform(k1, (d_in, d_out), jnp.float32, -scale, scale)
        w_r = jax.random.uniform(k2, (d_in, d_out), jnp.float32, -scale, scale)
        b = jax.random.uniform(k3, (d_out,), jnp.float32, -scale, scale)
        params.append((w_l, w_r, b))
    return params


# ----------------------------- references (pure JAX) --------------------------
def bsage_reference(x, edge_index, params, match_kernel_numerics=False):
    """Pure-JAX reference.
    match_kernel_numerics=True mirrors the kernel's numerics (bf16 inputs /
    weights / counts, f32 accumulation, f32 1/deg scaling, bf16 layer carry)."""
    n = x.shape[0]
    a_cnt, inv_deg = build_count_adjacency(edge_index, n)
    inv_deg = inv_deg[:, None]
    num_layers = len(params)
    if match_kernel_numerics:
        a_mm = a_cnt.astype(jnp.bfloat16)
        h = x.astype(jnp.bfloat16)
        for i, (w_l, w_r, b) in enumerate(params):
            hl = jnp.dot(h, w_l.astype(jnp.bfloat16),
                         preferred_element_type=jnp.float32)
            agg = jnp.dot(a_mm, hl.astype(jnp.bfloat16),
                          preferred_element_type=jnp.float32) * inv_deg
            root = jnp.dot(h, w_r.astype(jnp.bfloat16),
                           preferred_element_type=jnp.float32)
            y = agg + (root + b[None, :])
            if i != num_layers - 1:
                y = jnp.maximum(y, 0.0)
                h = y.astype(jnp.bfloat16)
            else:
                h = y
        return h
    a_mean = a_cnt * inv_deg
    h = x.astype(jnp.float32)
    for i, (w_l, w_r, b) in enumerate(params):
        y = jnp.dot(a_mean, jnp.dot(h, w_l)) + jnp.dot(h, w_r) + b[None, :]
        if i != num_layers - 1:
            y = jnp.maximum(y, 0.0)
        h = y
    return h


# ----------------------------- demo ------------------------------------------
if __name__ == "__main__":
    key = jax.random.PRNGKey(0)

    # Small synthetic graph
    num_nodes = 16
    in_channels = 32
    hidden_channels = 32
    out_channels = 8
    num_layers = 3
    num_edges = 48

    kx, ke_src, ke_dst, kp = jax.random.split(key, 4)
    x = jax.random.normal(kx, (num_nodes, in_channels), dtype=jnp.float32)
    src = jax.random.randint(ke_src, (num_edges,), 0, num_nodes)
    dst = jax.random.randint(ke_dst, (num_edges,), 0, num_nodes)
    edge_index = jnp.stack([src, dst], axis=0)  # (2, E), row0=source, row1=target

    params = init_bsage_params(kp, in_channels, hidden_channels,
                               out_channels, num_layers)

    out = bsage_forward(x, edge_index, params)
    out = jax.block_until_ready(out)
    assert out.shape == (num_nodes, out_channels)

    # Tight check vs. a reference that mirrors the kernel's bf16/f32 numerics.
    ref_matched = bsage_reference(x, edge_index, params, match_kernel_numerics=True)
    assert jnp.allclose(out, ref_matched, atol=2e-3, rtol=2e-3), \
        "mismatch vs bf16-matched reference"

    # Loose semantic check vs. the full-f32 reference (bf16 quantization error).
    ref_f32 = bsage_reference(x, edge_index, params, match_kernel_numerics=False)
    assert jnp.allclose(out, ref_f32, atol=8e-2, rtol=8e-2), \
        "mismatch vs f32 reference"

    print("KERNEL_OK")
</pallas_src>

<mosaic_0001>
module attributes {stable_mosaic.version = 11 : i64} {
  func.func @_proj_kernel(%arg0: i32, %arg1: memref<128x128xbf16, #tpu.memory_space<vmem>>, %arg2: memref<128x256xbf16, #tpu.memory_space<vmem>>, %arg3: memref<1x256xf32, #tpu.memory_space<vmem>>, %arg4: memref<128x128xbf16, #tpu.memory_space<vmem>>, %arg5: memref<128x128xf32, #tpu.memory_space<vmem>>) attributes {dimension_semantics = [#tpu.dimension_semantics<parallel>], iteration_bounds = array<i64: 1>, scalar_prefetch = 0 : i64, scratch_operands = 0 : i64, tpu.core_type = #tpu.core_type<tc>, window_params = [{transform_indices = @transform_0, window_bounds = array<i64: 128, 128>}, {pipeline_mode = #tpu.pipeline_mode<synchronous>, transform_indices = @transform_1, window_bounds = array<i64: 128, 256>}, {pipeline_mode = #tpu.pipeline_mode<synchronous>, transform_indices = @transform_2, window_bounds = array<i64: 1, 256>}, {transform_indices = @transform_3, window_bounds = array<i64: 128, 128>}, {transform_indices = @transform_4, window_bounds = array<i64: 128, 128>}]} {
    %c0 = arith.constant 0 : index
    %c0_0 = arith.constant 0 : index
    %0 = vector.load %arg1[%c0, %c0_0] : memref<128x128xbf16, #tpu.memory_space<vmem>>, vector<128x128xbf16>
    %c0_1 = arith.constant 0 : index
    %c0_2 = arith.constant 0 : index
    %1 = vector.load %arg2[%c0_1, %c0_2] : memref<128x256xbf16, #tpu.memory_space<vmem>>, vector<128x256xbf16>
    %cst = arith.constant dense<0.000000e+00> : vector<128x256xf32>
    %2 = tpu.matmul %0, %1, %cst {dimension_numbers = #tpu.dot_dimension_numbers<[1], [0], [0], [1], [0, 0, 1, 1], [], []>} : vector<128x128xbf16>, vector<128x256xbf16>, vector<128x256xf32> -> vector<128x256xf32>
    %c0_3 = arith.constant 0 : index
    %c0_4 = arith.constant 0 : index
    %3 = vector.load %arg3[%c0_3, %c0_4] : memref<1x256xf32, #tpu.memory_space<vmem>>, vector<1x256xf32>
    %4 = vector.broadcast %3 : vector<1x256xf32> to vector<128x256xf32>
    %5 = arith.addf %2, %4 : vector<128x256xf32>
    %6 = vector.extract_strided_slice %5 {offsets = [0, 0], sizes = [128, 128], strides = [1, 1]} : vector<128x256xf32> to vector<128x128xf32>
    %7 = arith.truncf %6 : vector<128x128xf32> to vector<128x128xbf16>
    %c0_5 = arith.constant 0 : index
    %c0_6 = arith.constant 0 : index
    %8 = vector.load %arg4[%c0_5, %c0_6] : memref<128x128xbf16, #tpu.memory_space<vmem>>, vector<128x128xbf16>
    tpu.vector_store %arg4[%c0_5, %c0_6], %7 {strides = array<i32>} : memref<128x128xbf16, #tpu.memory_space<vmem>>, vector<128x128xbf16>,
    %9 = vector.extract_strided_slice %5 {offsets = [0, 128], sizes = [128, 128], strides = [1, 1]} : vector<128x256xf32> to vector<128x128xf32>
    %c0_7 = arith.constant 0 : index
    %c0_8 = arith.constant 0 : index
    %10 = vector.load %arg5[%c0_7, %c0_8] : memref<128x128xf32, #tpu.memory_space<vmem>>, vector<128x128xf32>
    tpu.vector_store %arg5[%c0_7, %c0_8], %9 {strides = array<i32>} : memref<128x128xf32, #tpu.memory_space<vmem>>, vector<128x128xf32>,
    return
  }
  func.func @transform_0(%arg0: i32) -> (i32, i32) {
    %c0_i32 = arith.constant 0 : i32
    %c0_i32_0 = arith.constant 0 : i32
    return %arg0, %c0_i32 : i32, i32
  }
  func.func @transform_1(%arg0: i32) -> (i32, i32) {
    %c0_i32 = arith.constant 0 : i32
    %c0_i32_0 = arith.constant 0 : i32
    %c0_i32_1 = arith.constant 0 : i32
    return %c0_i32, %c0_i32_0 : i32, i32
  }
  func.func @transform_2(%arg0: i32) -> (i32, i32) {
    %c0_i32 = arith.constant 0 : i32
    %c0_i32_0 = arith.constant 0 : i32
    %c0_i32_1 = arith.constant 0 : i32
    return %c0_i32, %c0_i32_0 : i32, i32
  }
  func.func @transform_3(%arg0: i32) -> (i32, i32) {
    %c0_i32 = arith.constant 0 : i32
    %c0_i32_0 = arith.constant 0 : i32
    return %arg0, %c0_i32 : i32, i32
  }
  func.func @transform_4(%arg0: i32) -> (i32, i32) {
    %c0_i32 = arith.constant 0 : i32
    %c0_i32_0 = arith.constant 0 : i32
    return %arg0, %c0_i32 : i32, i32
  }
}

</mosaic_0001>

<llo_original>
// kernel: tpu_custom_call.1
$region0: #{tpu_custom_call.1}
  #allocation0 [shape = 'u32[]', space=smem, size = 0x4, offset = 0x4, fixed_abs, tag = 'smem constant byte address 0x4 - core index']
  #allocation1 [shape = 'u32[144,128]{1,0:T(1,128)}', space=vmem, size = 0x12000, scoped, tag = 'internal scratch']
  %s0 = inlined_call_operand.hbm [shape: bf16[128,128], index: 0, kind: input, shape index: {}]
  %s1 = inlined_call_operand.hbm [shape: bf16[128,256], index: 1, kind: input, shape index: {}]
  %s2 = inlined_call_operand.vmem [shape: f32[1,256], index: 2, kind: input, shape index: {}]
  %s3 = inlined_call_operand.hbm [shape: bf16[128,128], index: 3, kind: output, shape index: {0}]
  %s4 = inlined_call_operand.hbm [shape: f32[128,128], index: 4, kind: output, shape index: {1}]
  %5 = xla_tuple %s3, %s4
  %s6 = sld [smem:[#allocation0]]
  $region38: #{tpu_custom_call.1} parent=0
    _
  %s8 = ssub.s32 1, %s6
  %s9 = scalar_select 0, %s8, %s6
  $region1: #{tpu_custom_call.1} parent=0
    #allocation2 [shape = 'u8[32768]{0}', space=vmem, size = 0x8000, scoped, tag = 'input window, operand 0, single buffered']
    #allocation3 [shape = 's32[1]{0}', space=sflag, size = 0x4, scoped, tag = 'scoped memory for tpu_custom_call.1']
    #allocation4 [shape = 's32[1]{0}', space=sflag, size = 0x4, scoped, tag = 'scoped memory for tpu_custom_call.1']
    #allocation5 [shape = 'u8[65536]{0}', space=vmem, size = 0x10000, scoped, tag = 'input window, operand 1, single buffered']
    #allocation6 [shape = 's32[1]{0}', space=sflag, size = 0x4, scoped, tag = 'scoped memory for tpu_custom_call.1']
    #allocation7 [shape = 'u8[32768]{0}', space=vmem, size = 0x8000, scoped, tag = 'output window, operand 0, single buffered']
    #allocation8 [shape = 'u8[65536]{0}', space=vmem, size = 0x10000, scoped, tag = 'output window, operand 1, single buffered']
    #allocation9 [shape = 's32[1]{0}', space=sflag, size = 0x4, scoped, tag = 'scoped memory for tpu_custom_call.1']
    %10 = vsyncpa [#allocation3], 0
    %11 = vsyncpa [#allocation6], 0
    %12 = vsyncpa [#allocation4], 0
    %13 = vsyncpa [#allocation9], 0
    // Predicated region
    $region2: #{tpu_custom_call.1} parent=1 // pred_check
      _
    $region3: #{tpu_custom_call.1} parent=1 // pred_check_branch
      %15 = sbr.rel (0) target = $region5
    $region4: #{tpu_custom_call.1} parent=1 // pred_region
      %s17 = ssub.s32 1024, 1024
      %18 = vsyncadd [#allocation3], %s17
      %s19 = sshll.u32 [#allocation2], 4
      %s20 = int_to_ptr.vmem [resolvable:$true] %s19
      %25 = dma.hbm_to_vmem [thread:$0]  %s0, 1024, %s20, [#allocation3], 64, 64, 4
    $region5: #{tpu_custom_call.1} parent=1 // pred_fallthru
      _
    // Predicated region
    $region6: #{tpu_custom_call.1} parent=1 // pred_check
      _
    $region7: #{tpu_custom_call.1} parent=1 // pred_check_branch
      %27 = sbr.rel (0) target = $region9
    $region8: #{tpu_custom_call.1} parent=1 // pred_region
      %s29 = ssub.s32 2048, 2048
      %30 = vsyncadd [#allocation6], %s29
      %s31 = sshll.u32 [#allocation5], 4
      %s32 = int_to_ptr.vmem [resolvable:$true] %s31
      %37 = dma.hbm_to_vmem [thread:$0]  %s1, 2048, %s32, [#allocation6], 128, 128, 8
    $region9: #{tpu_custom_call.1} parent=1 // pred_fallthru
      _
    // Predicated region
    $region10: #{tpu_custom_call.1} parent=1 // pred_check
      _
    $region11: #{tpu_custom_call.1} parent=1 // pred_check_branch
      %39 = sbr.rel (0) target = $region13
    $region12: #{tpu_custom_call.1} parent=1 // pred_region
      _
    $region13: #{tpu_custom_call.1} parent=1 // pred_fallthru
      _
    // Predicated region
    $region14: #{tpu_custom_call.1} parent=1 // pred_check
      _
    $region15: #{tpu_custom_call.1} parent=1 // pred_check_branch
      %41 = sbr.rel (0) target = $region17
    $region16: #{tpu_custom_call.1} parent=1 // pred_region
      %42 = dma.done [#allocation3], 1024
    $region17: #{tpu_custom_call.1} parent=1 // pred_fallthru
      _
    // Predicated region
    $region18: #{tpu_custom_call.1} parent=1 // pred_check
      _
    $region19: #{tpu_custom_call.1} parent=1 // pred_check_branch
      %44 = sbr.rel (0) target = $region21
    $region20: #{tpu_custom_call.1} parent=1 // pred_region
      %45 = dma.done [#allocation6], 2048
    $region21: #{tpu_custom_call.1} parent=1 // pred_fallthru
      _
    %v47 = vld [vmem:[#allocation2] sm:$0xf]
    %v48 = vld [vmem:[#allocation2 + $0x4] sm:$0xf]
    %v49 = vld [vmem:[#allocation2 + $0x8] sm:$0xf]
    %v50 = vld [vmem:[#allocation2 + $0xc] sm:$0xf]
    %v51 = vld [vmem:[#allocation2 + $0x10] sm:$0xf]
    %v52 = vld [vmem:[#allocation2 + $0x14] sm:$0xf]
    %v53 = vld [vmem:[#allocation2 + $0x18] sm:$0xf]
    %v54 = vld [vmem:[#allocation2 + $0x1c] sm:$0xf]
    %v55 = vld [vmem:[#allocation2 + $0x20] sm:$0xf]
    %v56 = vld [vmem:[#allocation2 + $0x24] sm:$0xf]
    %v57 = vld [vmem:[#allocation2 + $0x28] sm:$0xf]
    %v58 = vld [vmem:[#allocation2 + $0x2c] sm:$0xf]
    %v59 = vld [vmem:[#allocation2 + $0x30] sm:$0xf]
    %v60 = vld [vmem:[#allocation2 + $0x34] sm:$0xf]
    %v61 = vld [vmem:[#allocation2 + $0x38] sm:$0xf]
    %v62 = vld [vmem:[#allocation2 + $0x3c] sm:$0xf]
    %v63 = vld [vmem:[#allocation5] sm:$0xff]
    %v64 = vld [vmem:[#allocation5 + $0x8] sm:$0xff]
    %v65 = vld [vmem:[#allocation5 + $0x10] sm:$0xff]
    %v66 = vld [vmem:[#allocation5 + $0x18] sm:$0xff]
    %v67 = vld [vmem:[#allocation5 + $0x20] sm:$0xff]
    %v68 = vld [vmem:[#allocation5 + $0x28] sm:$0xff]
    %v69 = vld [vmem:[#allocation5 + $0x30] sm:$0xff]
    %v70 = vld [vmem:[#allocation5 + $0x38] sm:$0xff]
    %v71 = vld [vmem:[#allocation5 + $0x40] sm:$0xff]
    %v72 = vld [vmem:[#allocation5 + $0x48] sm:$0xff]
    %v73 = vld [vmem:[#allocation5 + $0x50] sm:$0xff]
    %v74 = vld [vmem:[#allocation5 + $0x58] sm:$0xff]
    %v75 = vld [vmem:[#allocation5 + $0x60] sm:$0xff]
    %v76 = vld [vmem:[#allocation5 + $0x68] sm:$0xff]
    %v77 = vld [vmem:[#allocation5 + $0x70] sm:$0xff]
    %v78 = vld [vmem:[#allocation5 + $0x78] sm:$0xff]
    %v79 = vld [vmem:[%s2] sm:$0x3]
    %v81 = vlaneseq
    %v82 = vshrl.u32 %v81, 7
    %v83 = vsub.s32 0, %v82
    %v84 = vrot.slane %v79, %v83
    %v85 = vlaneseq
    %v86 = vshrl.u32 %v85, 7
    %v87 = vsub.s32 1, %v86
    %v88 = vrot.slane %v79, %v87
    %v107 = vunpack.c.l.b16 %v47
    %v108 = vunpack.c.l.b16 %v48
    %v109 = vunpack.c.l.b16 %v49
    %v110 = vunpack.c.l.b16 %v50
    %v111 = vunpack.c.l.b16 %v51
    %v112 = vunpack.c.l.b16 %v52
    %v113 = vunpack.c.l.b16 %v53
    %v114 = vunpack.c.l.b16 %v54
    %v115 = vunpack.c.l.b16 %v55
    %v116 = vunpack.c.l.b16 %v56
    %v117 = vunpack.c.l.b16 %v57
    %v118 = vunpack.c.l.b16 %v58
    %v119 = vunpack.c.l.b16 %v59
    %v120 = vunpack.c.l.b16 %v60
    %v121 = vunpack.c.l.b16 %v61
    %v122 = vunpack.c.l.b16 %v62
    %v123 = vpack.c.b16 %v108, %v107
    %v124 = vpack.c.b16 %v110, %v109
    %v125 = vpack.c.b16 %v112, %v111
    %v126 = vpack.c.b16 %v114, %v113
    %v127 = vpack.c.b16 %v116, %v115
    %v128 = vpack.c.b16 %v118, %v117
    %v129 = vpack.c.b16 %v120, %v119
    %v130 = vpack.c.b16 %v122, %v121
    %v155 = vunpack.c.l.b16 %v63
    %v156 = vunpack.c.h.b16 %v63
    %v157 = vunpack.c.l.b16 %v64
    %v158 = vunpack.c.h.b16 %v64
    %v159 = vunpack.c.l.b16 %v65
    %v160 = vunpack.c.h.b16 %v65
    %v161 = vunpack.c.l.b16 %v66
    %v162 = vunpack.c.h.b16 %v66
    %v163 = vunpack.c.l.b16 %v67
    %v164 = vunpack.c.h.b16 %v67
    %v165 = vunpack.c.l.b16 %v68
    %v166 = vunpack.c.h.b16 %v68
    %v167 = vunpack.c.l.b16 %v69
    %v168 = vunpack.c.h.b16 %v69
    %v169 = vunpack.c.l.b16 %v70
    %v170 = vunpack.c.h.b16 %v70
    %v171 = vunpack.c.l.b16 %v71
    %v172 = vunpack.c.h.b16 %v71
    %v173 = vunpack.c.l.b16 %v72
    %v174 = vunpack.c.h.b16 %v72
    %v175 = vunpack.c.l.b16 %v73
    %v176 = vunpack.c.h.b16 %v73
    %v177 = vunpack.c.l.b16 %v74
    %v178 = vunpack.c.h.b16 %v74
    %v179 = vunpack.c.l.b16 %v75
    %v180 = vunpack.c.h.b16 %v75
    %v181 = vunpack.c.l.b16 %v76
    %v182 = vunpack.c.h.b16 %v76
    %v183 = vunpack.c.l.b16 %v77
    %v184 = vunpack.c.h.b16 %v77
    %v185 = vunpack.c.l.b16 %v78
    %v186 = vunpack.c.h.b16 %v78
    %v187 = vpack.c.b16 %v157, %v155
    %v188 = vpack.c.b16 %v158, %v156
    %v189 = vpack.c.b16 %v161, %v159
    %v190 = vpack.c.b16 %v162, %v160
    %v191 = vpack.c.b16 %v165, %v163
    %v192 = vpack.c.b16 %v166, %v164
    %v193 = vpack.c.b16 %v169, %v167
    %v194 = vpack.c.b16 %v170, %v168
    %v195 = vpack.c.b16 %v173, %v171
    %v196 = vpack.c.b16 %v174, %v172
    %v197 = vpack.c.b16 %v177, %v175
    %v198 = vpack.c.b16 %v178, %v176
    %v199 = vpack.c.b16 %v181, %v179
    %v200 = vpack.c.b16 %v182, %v180
    %v201 = vpack.c.b16 %v185, %v183
    %v202 = vpack.c.b16 %v186, %v184
    %219 = vmatprep.subr.bf16.mxu0 %v188
    %220 = vmatpush1.bf16.msra.mxu0 %v187
    %221 = vmatprep.subr.bf16.mxu0 %v190
    %222 = vmatpush1.bf16.msra.mxu0 %v189
    %223 = vmatprep.subr.bf16.mxu0 %v192
    %224 = vmatpush1.bf16.msra.mxu0 %v191
    %225 = vmatprep.subr.bf16.mxu0 %v194
    %226 = vmatpush1.bf16.msra.mxu0 %v193
    %227 = vmatprep.subr.bf16.mxu0 %v196
    %228 = vmatpush1.bf16.msra.mxu0 %v195
    %229 = vmatprep.subr.bf16.mxu0 %v198
    %230 = vmatpush1.bf16.msra.mxu0 %v197
    %231 = vmatprep.subr.bf16.mxu0 %v200
    %232 = vmatpush1.bf16.msra.mxu0 %v199
    %233 = vmatprep.subr.bf16.mxu0 %v202
    %234 = vmatpush1.bf16.msra.mxu0 %v201
    %235 = vmatprep.subr.bf16.mxu0 0
    %236 = vmatpush1.bf16.msra.mxu0 0
    %237 = vmatprep.subr.bf16.mxu0 0
    %238 = vmatpush1.bf16.msra.mxu0 0
    %239 = vmatprep.subr.bf16.mxu0 0
    %240 = vmatpush1.bf16.msra.mxu0 0
    %241 = vmatprep.subr.bf16.mxu0 0
    %242 = vmatpush1.bf16.msra.mxu0 0
    %243 = vmatprep.subr.bf16.mxu0 0
    %244 = vmatpush1.bf16.msra.mxu0 0
    %245 = vmatprep.subr.bf16.mxu0 0
    %246 = vmatpush1.bf16.msra.mxu0 0
    %247 = vmatprep.subr.bf16.mxu0 0
    %248 = vmatpush1.bf16.msra.mxu0 0
    %249 = vmatprep.subr.bf16.mxu0 0
    %250 = vmatpush1.bf16.msra.mxu0 0
    %251 = vmatprep.mubr.bf16.mxu0 0
    %252 = vmatmul.mubr.bf16.gmra.mrb[0].mxu0 %v123
    %v253 = vpop.f32.mrb[0].mxu0
    %v254 = vadd.f32 %v84, %v253
    %v255 = vpop.f32.mrb[0].mxu0
    %v256 = vadd.f32 %v88, %v255
    %v257 = vpop.f32.mrb[0].mxu0
    %v258 = vadd.f32 %v84, %v257
    %v259 = vpop.f32.mrb[0].mxu0
    %v260 = vadd.f32 %v88, %v259
    %261 = vmatprep.mubr.bf16.mxu0 0
    %262 = vmatmul.mubr.bf16.gmra.mrb[0].mxu0 %v124
    %v263 = vpop.f32.mrb[0].mxu0
    %v264 = vadd.f32 %v84, %v263
    %v265 = vpop.f32.mrb[0].mxu0
    %v266 = vadd.f32 %v88, %v265
    %v267 = vpop.f32.mrb[0].mxu0
    %v268 = vadd.f32 %v84, %v267
    %v269 = vpop.f32.mrb[0].mxu0
    %v270 = vadd.f32 %v88, %v269
    %271 = vmatprep.mubr.bf16.mxu0 0
    %272 = vmatmul.mubr.bf16.gmra.mrb[0].mxu0 %v125
    %v273 = vpop.f32.mrb[0].mxu0
    %v274 = vadd.f32 %v84, %v273
    %v275 = vpop.f32.mrb[0].mxu0
    %v276 = vadd.f32 %v88, %v275
    %v277 = vpop.f32.mrb[0].mxu0
    %v278 = vadd.f32 %v84, %v277
    %v279 = vpop.f32.mrb[0].mxu0
    %v280 = vadd.f32 %v88, %v279
    %281 = vmatprep.mubr.bf16.mxu0 0
    %282 = vmatmul.mubr.bf16.gmra.mrb[0].mxu0 %v126
    %v283 = vpop.f32.mrb[0].mxu0
    %v284 = vadd.f32 %v84, %v283
    %v285 = vpop.f32.mrb[0].mxu0
    %v286 = vadd.f32 %v88, %v285
    %v287 = vpop.f32.mrb[0].mxu0
    %v288 = vadd.f32 %v84, %v287
    %v289 = vpop.f32.mrb[0].mxu0
    %v290 = vadd.f32 %v88, %v289
    %291 = vmatprep.mubr.bf16.mxu0 0
    %292 = vmatmul.mubr.bf16.gmra.mrb[0].mxu0 %v127
    %v293 = vpop.f32.mrb[0].mxu0
    %v294 = vadd.f32 %v84, %v293
    %v295 = vpop.f32.mrb[0].mxu0
    %v296 = vadd.f32 %v88, %v295
    %v297 = vpop.f32.mrb[0].mxu0
    %v298 = vadd.f32 %v84, %v297
    %v299 = vpop.f32.mrb[0].mxu0
    %v300 = vadd.f32 %v88, %v299
    %301 = vmatprep.mubr.bf16.mxu0 0
    %302 = vmatmul.mubr.bf16.gmra.mrb[0].mxu0 %v128
    %v303 = vpop.f32.mrb[0].mxu0
    %v304 = vadd.f32 %v84, %v303
    %v305 = vpop.f32.mrb[0].mxu0
    %v306 = vadd.f32 %v88, %v305
    %v307 = vpop.f32.mrb[0].mxu0
    %v308 = vadd.f32 %v84, %v307
    %v309 = vpop.f32.mrb[0].mxu0
    %v310 = vadd.f32 %v88, %v309
    %311 = vmatprep.mubr.bf16.mxu0 0
    %312 = vmatmul.mubr.bf16.gmra.mrb[0].mxu0 %v129
    %v313 = vpop.f32.mrb[0].mxu0
    %v314 = vadd.f32 %v84, %v313
    %v315 = vpop.f32.mrb[0].mxu0
    %v316 = vadd.f32 %v88, %v315
    %v317 = vpop.f32.mrb[0].mxu0
    %v318 = vadd.f32 %v84, %v317
    %v319 = vpop.f32.mrb[0].mxu0
    %v320 = vadd.f32 %v88, %v319
    %321 = vmatprep.mubr.bf16.mxu0 0
    %322 = vmatmul.mubr.bf16.gmra.mrb[0].mxu0 %v130
    %v323 = vpop.f32.mrb[0].mxu0
    %v324 = vadd.f32 %v84, %v323
    %v325 = vpop.f32.mrb[0].mxu0
    %v326 = vadd.f32 %v88, %v325
    %v327 = vpop.f32.mrb[0].mxu0
    %v328 = vadd.f32 %v84, %v327
    %v329 = vpop.f32.mrb[0].mxu0
    %v330 = vadd.f32 %v88, %v329
    %331 = vdwg.mxu0
    %v332 = vpack.c.bf16 %v258, %v254
    %v333 = vpack.c.bf16 %v268, %v264
    %v334 = vpack.c.bf16 %v278, %v274
    %v335 = vpack.c.bf16 %v288, %v284
    %v336 = vpack.c.bf16 %v298, %v294
    %v337 = vpack.c.bf16 %v308, %v304
    %v338 = vpack.c.bf16 %v318, %v314
    %v339 = vpack.c.bf16 %v328, %v324
    %v348 = vunpack.c.l.b16 %v332
    %v349 = vunpack.c.h.b16 %v332
    %v350 = vunpack.c.l.b16 %v333
    %v351 = vunpack.c.h.b16 %v333
    %v352 = vunpack.c.l.b16 %v334
    %v353 = vunpack.c.h.b16 %v334
    %v354 = vunpack.c.l.b16 %v335
    %v355 = vunpack.c.h.b16 %v335
    %v356 = vunpack.c.l.b16 %v336
    %v357 = vunpack.c.h.b16 %v336
    %v358 = vunpack.c.l.b16 %v337
    %v359 = vunpack.c.h.b16 %v337
    %v360 = vunpack.c.l.b16 %v338
    %v361 = vunpack.c.h.b16 %v338
    %v362 = vunpack.c.l.b16 %v339
    %v363 = vunpack.c.h.b16 %v339
    %v364 = vpack.c.b16 %v348, %v348
    %v365 = vpack.c.b16 %v349, %v349
    %v366 = vpack.c.b16 %v350, %v350
    %v367 = vpack.c.b16 %v351, %v351
    %v368 = vpack.c.b16 %v352, %v352
    %v369 = vpack.c.b16 %v353, %v353
    %v370 = vpack.c.b16 %v354, %v354
    %v371 = vpack.c.b16 %v355, %v355
    %v372 = vpack.c.b16 %v356, %v356
    %v373 = vpack.c.b16 %v357, %v357
    %v374 = vpack.c.b16 %v358, %v358
    %v375 = vpack.c.b16 %v359, %v359
    %v376 = vpack.c.b16 %v360, %v360
    %v377 = vpack.c.b16 %v361, %v361
    %v378 = vpack.c.b16 %v362, %v362
    %v379 = vpack.c.b16 %v363, %v363
    %396 = vst [vmem:[#allocation7] sm:$0xf] %v364
    %397 = vst [vmem:[#allocation7 + $0x4] sm:$0xf] %v365
    %398 = vst [vmem:[#allocation7 + $0x8] sm:$0xf] %v366
    %399 = vst [vmem:[#allocation7 + $0xc] sm:$0xf] %v367
    %400 = vst [vmem:[#allocation7 + $0x10] sm:$0xf] %v368
    %401 = vst [vmem:[#allocation7 + $0x14] sm:$0xf] %v369
    %402 = vst [vmem:[#allocation7 + $0x18] sm:$0xf] %v370
    %403 = vst [vmem:[#allocation7 + $0x1c] sm:$0xf] %v371
    %404 = vst [vmem:[#allocation7 + $0x20] sm:$0xf] %v372
    %405 = vst [vmem:[#allocation7 + $0x24] sm:$0xf] %v373
    %406 = vst [vmem:[#allocation7 + $0x28] sm:$0xf] %v374
    %407 = vst [vmem:[#allocation7 + $0x2c] sm:$0xf] %v375
    %408 = vst [vmem:[#allocation7 + $0x30] sm:$0xf] %v376
    %409 = vst [vmem:[#allocation7 + $0x34] sm:$0xf] %v377
    %410 = vst [vmem:[#allocation7 + $0x38] sm:$0xf] %v378
    %411 = vst [vmem:[#allocation7 + $0x3c] sm:$0xf] %v379
    %412 = vst [vmem:[#allocation8] sm:$0xff] %v256
    %413 = vst [vmem:[#allocation8 + $0x8] sm:$0xff] %v260
    %414 = vst [vmem:[#allocation8 + $0x10] sm:$0xff] %v266
    %415 = vst [vmem:[#allocation8 + $0x18] sm:$0xff] %v270
    %416 = vst [vmem:[#allocation8 + $0x20] sm:$0xff] %v276
    %417 = vst [vmem:[#allocation8 + $0x28] sm:$0xff] %v280
    %418 = vst [vmem:[#allocation8 + $0x30] sm:$0xff] %v286
    %419 = vst [vmem:[#allocation8 + $0x38] sm:$0xff] %v290
    %420 = vst [vmem:[#allocation8 + $0x40] sm:$0xff] %v296
    %421 = vst [vmem:[#allocation8 + $0x48] sm:$0xff] %v300
    %422 = vst [vmem:[#allocation8 + $0x50] sm:$0xff] %v306
    %423 = vst [vmem:[#allocation8 + $0x58] sm:$0xff] %v310
    %424 = vst [vmem:[#allocation8 + $0x60] sm:$0xff] %v316
    %425 = vst [vmem:[#allocation8 + $0x68] sm:$0xff] %v320
    %426 = vst [vmem:[#allocation8 + $0x70] sm:$0xff] %v326
    %427 = vst [vmem:[#allocation8 + $0x78] sm:$0xff] %v330
    // Predicated region
    $region22: #{tpu_custom_call.1} parent=1 // pred_check
      _
    $region23: #{tpu_custom_call.1} parent=1 // pred_check_branch
      %429 = sbr.rel (0) target = $region25
    $region24: #{tpu_custom_call.1} parent=1 // pred_region
      %s431 = ssub.s32 1024, 1024
      %432 = vsyncadd [#allocation4], %s431
      %s433 = sshll.u32 [#allocation7], 4
      %s434 = int_to_ptr.vmem [resolvable:$true] %s433
      %439 = dma.vmem_to_hbm [thread:$0]  %s434, 1024, %s3, [#allocation4], 64, 64, 4
    $region25: #{tpu_custom_call.1} parent=1 // pred_fallthru
      _
    // Predicated region
    $region26: #{tpu_custom_call.1} parent=1 // pred_check
      _
    $region27: #{tpu_custom_call.1} parent=1 // pred_check_branch
      %441 = sbr.rel (0) target = $region29
    $region28: #{tpu_custom_call.1} parent=1 // pred_region
      %s443 = ssub.s32 2048, 2048
      %444 = vsyncadd [#allocation9], %s443
      %s445 = sshll.u32 [#allocation8], 4
      %s446 = int_to_ptr.vmem [resolvable:$true] %s445
      %451 = dma.vmem_to_hbm [thread:$0]  %s446, 2048, %s4, [#allocation9], 128, 128, 8
    $region29: #{tpu_custom_call.1} parent=1 // pred_fallthru
      _
    // Predicated region
    $region30: #{tpu_custom_call.1} parent=1 // pred_check
      _
    $region31: #{tpu_custom_call.1} parent=1 // pred_check_branch
      %453 = sbr.rel (0) target = $region33
    $region32: #{tpu_custom_call.1} parent=1 // pred_region
      %454 = dma.done [#allocation4], 1024
    $region33: #{tpu_custom_call.1} parent=1 // pred_fallthru
      _
    // Predicated region
    $region34: #{tpu_custom_call.1} parent=1 // pred_check
      _
    $region35: #{tpu_custom_call.1} parent=1 // pred_check_branch
      %456 = sbr.rel (0) target = $region37
    $region36: #{tpu_custom_call.1} parent=1 // pred_region
      %457 = dma.done [#allocation9], 2048
    $region37: #{tpu_custom_call.1} parent=1 // pred_fallthru
      _
    %458 = vsyncpa [#allocation3], 1
    %459 = vsyncpa [#allocation6], 1
    %460 = vsyncpa [#allocation4], 1
    %461 = vsyncpa [#allocation9], 1

</llo_original>
